<compile_context>
chip_gen: v7x
topology: tpu7x:2x2x1
jax: 0.10.0
libtpu: 0.0.40
codegen_flags: <defaults>
</compile_context>

<pallas_src>
import jax
import jax.numpy as jnp
from jax import lax
from jax.experimental import pallas as pl
from jax.experimental.pallas import tpu as pltpu

D_IN = 8        # train_x.shape[1]  (Titanic feature count; synthetic choice)
HIDDEN = 100
H_PAD = 128     # lane-dense padded hidden width
N_MID = 10      # number of Linear(100,100)+ReLU blocks after the first layer
BATCH = 8
MAX_TILE = 256  # rows per grid step for large batches


def _round_up(n, m):
    return ((n + m - 1) // m) * m


def mlp_kernel(x_ref, w_in_ref, b_in_ref, w_mid_hbm, b_mid_ref,
               w_out_ref, b_out_ref, o_ref, w_buf, sem):
    def fetch(layer, slot):
        pltpu.make_async_copy(w_mid_hbm.at[layer], w_buf.at[slot],
                              sem.at[slot]).start()

    # Kick off the DMA for mid-layer 0 weights; it overlaps with the first
    # (D_IN -> 128) matmul below.
    fetch(0, 0)

    # First layer: (TM, D_IN) @ (D_IN, 128) + (1, 128), ReLU.  bf16 MXU inputs,
    # f32 accumulation.
    h = jnp.dot(x_ref[...].astype(jnp.bfloat16), w_in_ref[...],
                preferred_element_type=jnp.float32)
    h = jnp.maximum(h + b_in_ref[...], 0.0)

    # 10 hidden layers, fori_loop (bounded live ranges), manual double-buffered
    # weight prefetch from HBM.
    def body(i, h):
        slot = i & 1
        # Wait for this layer's weights to land in w_buf[slot].
        pltpu.make_async_copy(w_mid_hbm.at[0], w_buf.at[slot],
                              sem.at[slot]).wait()

        # Prefetch next layer's weights into the other buffer.
        @pl.when(i + 1 < N_MID)
        def _():
            fetch(i + 1, 1 - slot)

        hn = jnp.dot(h.astype(jnp.bfloat16), w_buf[slot],
                     preferred_element_type=jnp.float32)
        return jnp.maximum(hn + b_mid_ref[i], 0.0)

    h = lax.fori_loop(0, N_MID, body, h)

    # Output layer: N=1, so avoid a degenerate MXU matmul -- broadcast multiply
    # with the (1, 128) output-weight row and a lane reduction, in f32.
    o = jnp.sum(h * w_out_ref[...], axis=-1, keepdims=True) + b_out_ref[...]
    o_ref[...] = o.astype(o_ref.dtype)


def prepare_params(params):
    """ONE-TIME: zero-pad hidden dim 100 -> 128 and cast matmul weights to bf16.

    Call this once (e.g. right after init / checkpoint load) and pass the
    result to mlp_forward -- it is intentionally NOT in the per-call path.
    """
    w_in, b_in, w_mid, b_mid, w_out, b_out = params

    w_in_p = jnp.zeros((D_IN, H_PAD), jnp.float32).at[:, :HIDDEN].set(w_in)
    b_in_p = jnp.zeros((1, H_PAD), jnp.float32).at[:, :HIDDEN].set(b_in)
    w_mid_p = (jnp.zeros((N_MID, H_PAD, H_PAD), jnp.float32)
               .at[:, :HIDDEN, :HIDDEN].set(w_mid))
    b_mid_p = (jnp.zeros((N_MID, 1, H_PAD), jnp.float32)
               .at[:, :, :HIDDEN].set(b_mid))
    # Output weight as a lane-aligned (1, 128) row for the VPU reduction.
    w_out_row = jnp.zeros((1, H_PAD), jnp.float32).at[0, :HIDDEN].set(w_out[:, 0])

    return (w_in_p.astype(jnp.bfloat16), b_in_p,
            w_mid_p.astype(jnp.bfloat16), b_mid_p,
            w_out_row, b_out)


def mlp_forward(x, prepared):
    """x: (B, D_IN) f32.  prepared: output of prepare_params (padded/bf16)."""
    w_in, b_in, w_mid, b_mid, w_out_row, b_out = prepared
    B = x.shape[0]

    # Pad batch to a multiple of 16 (bf16 LHS sublane tile); tile large
    # batches at MAX_TILE rows per grid step.
    if B <= MAX_TILE:
        tm = max(16, _round_up(B, 16))
        b_pad = tm
    else:
        tm = MAX_TILE
        b_pad = _round_up(B, tm)
    if b_pad != B:
        x = jnp.pad(x, ((0, b_pad - B), (0, 0)))
    grid = (b_pad // tm,)

    flops = (2 * b_pad * D_IN * H_PAD
             + N_MID * 2 * b_pad * H_PAD * H_PAD
             + 3 * b_pad * H_PAD)                      # final mul + reduce + bias
    bytes_accessed = (x.size * 4
                      + w_in.size * 2 + b_in.size * 4
                      + w_mid.size * 2 + b_mid.size * 4
                      + w_out_row.size * 4 + b_out.size * 4
                      + b_pad * 1 * 4)

    out = pl.pallas_call(
        mlp_kernel,
        out_shape=jax.ShapeDtypeStruct((b_pad, 1), jnp.float32),
        grid=grid,
        in_specs=[
            pl.BlockSpec((tm, D_IN), lambda i: (i, 0)),            # x batch tile
            pl.BlockSpec((D_IN, H_PAD), lambda i: (0, 0)),         # w_in
            pl.BlockSpec((1, H_PAD), lambda i: (0, 0)),            # b_in
            pl.BlockSpec(memory_space=pl.ANY),                     # w_mid (HBM)
            pl.BlockSpec((N_MID, 1, H_PAD), lambda i: (0, 0, 0)),  # b_mid
            pl.BlockSpec((1, H_PAD), lambda i: (0, 0)),            # w_out row
            pl.BlockSpec((1, 1), lambda i: (0, 0)),                # b_out
        ],
        out_specs=pl.BlockSpec((tm, 1), lambda i: (i, 0)),
        scratch_shapes=[
            pltpu.VMEM((2, H_PAD, H_PAD), jnp.bfloat16),   # weight double buffer
            pltpu.SemaphoreType.DMA((2,)),
        ],
        compiler_params=pltpu.CompilerParams(
            dimension_semantics=("parallel",),
            vmem_limit_bytes=4 * 1024 * 1024),
        cost_estimate=pl.CostEstimate(flops=flops, transcendentals=0,
                                      bytes_accessed=bytes_accessed),
    )(x, w_in, b_in, w_mid, b_mid, w_out_row, b_out)
    return out[:B]


def init_params(key):
    """Deterministic init mimicking torch.nn.Linear default (U[-1/sqrt(fan_in), +])."""
    keys = jax.random.split(key, 6)

    def uni(k, shape, fan_in):
        bound = 1.0 / jnp.sqrt(jnp.float32(fan_in))
        return jax.random.uniform(k, shape, jnp.float32, -bound, bound)

    w_in = uni(keys[0], (D_IN, HIDDEN), D_IN)            # (in, out)
    b_in = uni(keys[1], (1, HIDDEN), D_IN)
    w_mid = uni(keys[2], (N_MID, HIDDEN, HIDDEN), HIDDEN)
    b_mid = uni(keys[3], (N_MID, 1, HIDDEN), HIDDEN)
    w_out = uni(keys[4], (HIDDEN, 1), HIDDEN)
    b_out = uni(keys[5], (1, 1), HIDDEN)
    return w_in, b_in, w_mid, b_mid, w_out, b_out


def mlp_reference(x, params):
    """Plain-JAX reference with the SAME arithmetic as the kernel
    (bf16 matmul inputs, f32 accumulation), on unpadded weights."""
    w_in, b_in, w_mid, b_mid, w_out, b_out = params
    h = jnp.dot(x.astype(jnp.bfloat16), w_in.astype(jnp.bfloat16),
                preferred_element_type=jnp.float32)
    h = jnp.maximum(h + b_in, 0.0)
    for i in range(N_MID):
        h = jnp.dot(h.astype(jnp.bfloat16), w_mid[i].astype(jnp.bfloat16),
                    preferred_element_type=jnp.float32)
        h = jnp.maximum(h + b_mid[i], 0.0)
    return h @ w_out + b_out


if __name__ == "__main__":
    key = jax.random.PRNGKey(0)
    k_x, k_p = jax.random.split(key)
    x = jax.random.normal(k_x, (BATCH, D_IN), jnp.float32)
    params = init_params(k_p)

    # One-time weight preparation (pad + bf16 cast), hoisted out of the hot path.
    prepared = jax.block_until_ready(prepare_params(params))
    forward = jax.jit(mlp_forward)

    out = jax.block_until_ready(forward(x, prepared))

    ref = mlp_reference(x, params)
    assert out.shape == (BATCH, 1)
    assert jnp.allclose(out, ref, atol=1e-3, rtol=1e-3), "mismatch vs reference"
    print("KERNEL_OK")
</pallas_src>

<mosaic_0001>
module attributes {stable_mosaic.version = 11 : i64} {
  func.func @mlp_kernel(%arg0: i32, %arg1: memref<16x8xf32, #tpu.memory_space<vmem>>, %arg2: memref<8x128xbf16, #tpu.memory_space<vmem>>, %arg3: memref<1x128xf32, #tpu.memory_space<vmem>>, %arg4: memref<10x128x128xbf16, #tpu.memory_space<any>>, %arg5: memref<10x1x128xf32, #tpu.memory_space<vmem>>, %arg6: memref<1x128xf32, #tpu.memory_space<vmem>>, %arg7: memref<1x1xf32, #tpu.memory_space<vmem>>, %arg8: memref<16x1xf32, #tpu.memory_space<vmem>>, %arg9: memref<2x128x128xbf16, #tpu.memory_space<vmem>>, %arg10: memref<2x!tpu.dma_semaphore, #tpu.memory_space<semaphore_mem>>) attributes {dimension_semantics = [#tpu.dimension_semantics<parallel>], iteration_bounds = array<i64: 1>, scalar_prefetch = 0 : i64, scratch_operands = 2 : i64, tpu.core_type = #tpu.core_type<tc>, window_params = [{transform_indices = @transform_0, window_bounds = array<i64: 16, 8>}, {pipeline_mode = #tpu.pipeline_mode<synchronous>, transform_indices = @transform_1, window_bounds = array<i64: 8, 128>}, {pipeline_mode = #tpu.pipeline_mode<synchronous>, transform_indices = @transform_2, window_bounds = array<i64: 1, 128>}, {}, {pipeline_mode = #tpu.pipeline_mode<synchronous>, transform_indices = @transform_4, window_bounds = array<i64: 10, 1, 128>}, {pipeline_mode = #tpu.pipeline_mode<synchronous>, transform_indices = @transform_5, window_bounds = array<i64: 1, 128>}, {pipeline_mode = #tpu.pipeline_mode<synchronous>, transform_indices = @transform_6, window_bounds = array<i64: 1, 1>}, {transform_indices = @transform_7, window_bounds = array<i64: 16, 1>}]} {
    %c0_i32 = arith.constant 0 : i32
    %c0_i32_0 = arith.constant 0 : i32
    %c0_i32_1 = arith.constant 0 : i32
    %c0_i32_2 = arith.constant 0 : i32
    %c0_i32_3 = arith.constant 0 : i32
    %0 = tpu.memref_slice %arg4[%c0_i32, %c0_i32_2, %c0_i32_3] : memref<10x128x128xbf16, #tpu.memory_space<any>> -> memref<1x128x128xbf16, #tpu.memory_space<any>>
    %1 = tpu.memref_squeeze %0 : memref<1x128x128xbf16, #tpu.memory_space<any>> -> memref<128x128xbf16, #tpu.memory_space<any>>
    %c0_i32_4 = arith.constant 0 : i32
    %c0_i32_5 = arith.constant 0 : i32
    %2 = tpu.memref_slice %arg9[%c0_i32_0, %c0_i32_4, %c0_i32_5] : memref<2x128x128xbf16, #tpu.memory_space<vmem>> -> memref<1x128x128xbf16, #tpu.memory_space<vmem>>
    %3 = tpu.memref_squeeze %2 : memref<1x128x128xbf16, #tpu.memory_space<vmem>> -> memref<128x128xbf16, #tpu.memory_space<vmem>>
    %4 = tpu.memref_slice %arg10[%c0_i32_1] : memref<2x!tpu.dma_semaphore, #tpu.memory_space<semaphore_mem>> -> memref<1x!tpu.dma_semaphore, #tpu.memory_space<semaphore_mem>>
    %5 = tpu.memref_squeeze %4 : memref<1x!tpu.dma_semaphore, #tpu.memory_space<semaphore_mem>> -> memref<!tpu.dma_semaphore, #tpu.memory_space<semaphore_mem>>
    tpu.enqueue_dma source(%1 : memref<128x128xbf16, #tpu.memory_space<any>>) target(%3 : memref<128x128xbf16, #tpu.memory_space<vmem>>) target_semaphore(%5 : memref<!tpu.dma_semaphore, #tpu.memory_space<semaphore_mem>>)
    %c0 = arith.constant 0 : index
    %c0_6 = arith.constant 0 : index
    %6 = vector.load %arg1[%c0, %c0_6] : memref<16x8xf32, #tpu.memory_space<vmem>>, vector<16x8xf32>
    %7 = arith.truncf %6 : vector<16x8xf32> to vector<16x8xbf16>
    %c0_7 = arith.constant 0 : index
    %c0_8 = arith.constant 0 : index
    %8 = vector.load %arg2[%c0_7, %c0_8] : memref<8x128xbf16, #tpu.memory_space<vmem>>, vector<8x128xbf16>
    %cst = arith.constant dense<0.000000e+00> : vector<16x128xf32>
    %9 = tpu.matmul %7, %8, %cst {dimension_numbers = #tpu.dot_dimension_numbers<[1], [0], [0], [1], [0, 0, 1, 1], [], []>} : vector<16x8xbf16>, vector<8x128xbf16>, vector<16x128xf32> -> vector<16x128xf32>
    %c0_9 = arith.constant 0 : index
    %c0_10 = arith.constant 0 : index
    %10 = vector.load %arg3[%c0_9, %c0_10] : memref<1x128xf32, #tpu.memory_space<vmem>>, vector<1x128xf32>
    %11 = vector.broadcast %10 : vector<1x128xf32> to vector<16x128xf32>
    %12 = arith.addf %9, %11 : vector<16x128xf32>
    %cst_11 = arith.constant 0.000000e+00 : f32
    %13 = vector.broadcast %cst_11 : f32 to vector<16x128xf32>
    %14 = arith.maximumf %12, %13 : vector<16x128xf32>
    %c0_i32_12 = arith.constant 0 : i32
    %c10_i32 = arith.constant 10 : i32
    %15 = arith.addi %c0_i32_12, %c10_i32 : i32
    %c1_i32 = arith.constant 1 : i32
    %16 = scf.for %arg11 = %c0_i32_12 to %15 step %c1_i32 iter_args(%arg12 = %14) -> (vector<16x128xf32>)  : i32 {
      %c1_i32_21 = arith.constant 1 : i32
      %26 = arith.andi %arg11, %c1_i32_21 : i32
      %c0_i32_22 = arith.constant 0 : i32
      %c0_i32_23 = arith.constant 0 : i32
      %c0_i32_24 = arith.constant 0 : i32
      %27 = tpu.memref_slice %arg4[%c0_i32_22, %c0_i32_23, %c0_i32_24] : memref<10x128x128xbf16, #tpu.memory_space<any>> -> memref<1x128x128xbf16, #tpu.memory_space<any>>
      %28 = tpu.memref_squeeze %27 : memref<1x128x128xbf16, #tpu.memory_space<any>> -> memref<128x128xbf16, #tpu.memory_space<any>>
      %c0_i32_25 = arith.constant 0 : i32
      %c0_i32_26 = arith.constant 0 : i32
      %29 = tpu.memref_slice %arg9[%26, %c0_i32_25, %c0_i32_26] : memref<2x128x128xbf16, #tpu.memory_space<vmem>> -> memref<1x128x128xbf16, #tpu.memory_space<vmem>>
      %30 = tpu.memref_squeeze %29 : memref<1x128x128xbf16, #tpu.memory_space<vmem>> -> memref<128x128xbf16, #tpu.memory_space<vmem>>
      %31 = tpu.memref_slice %arg10[%26] : memref<2x!tpu.dma_semaphore, #tpu.memory_space<semaphore_mem>> -> memref<1x!tpu.dma_semaphore, #tpu.memory_space<semaphore_mem>>
      %32 = tpu.memref_squeeze %31 : memref<1x!tpu.dma_semaphore, #tpu.memory_space<semaphore_mem>> -> memref<!tpu.dma_semaphore, #tpu.memory_space<semaphore_mem>>
      tpu.wait_dma2 semaphore(%32 : memref<!tpu.dma_semaphore, #tpu.memory_space<semaphore_mem>>) src(%28 : memref<128x128xbf16, #tpu.memory_space<any>>) dst(%30 : memref<128x128xbf16, #tpu.memory_space<vmem>>)
      %c1_i32_27 = arith.constant 1 : i32
      %33 = arith.addi %arg11, %c1_i32_27 : i32
      %c10_i32_28 = arith.constant 10 : i32
      %34 = arith.cmpi slt, %33, %c10_i32_28 : i32
      %35 = arith.extui %34 : i1 to i32
      %c0_i32_29 = arith.constant 0 : i32
      %36 = arith.cmpi ne, %35, %c0_i32_29 : i32
      scf.if %36 {
        %c1_i32_36 = arith.constant 1 : i32
        %49 = arith.addi %arg11, %c1_i32_36 : i32
        %c1_i32_37 = arith.constant 1 : i32
        %50 = arith.subi %c1_i32_37, %26 : i32
        %c0_i32_38 = arith.constant 0 : i32
        %c0_i32_39 = arith.constant 0 : i32
        %51 = tpu.memref_slice %arg4[%49, %c0_i32_38, %c0_i32_39] : memref<10x128x128xbf16, #tpu.memory_space<any>> -> memref<1x128x128xbf16, #tpu.memory_space<any>>
        %52 = tpu.memref_squeeze %51 : memref<1x128x128xbf16, #tpu.memory_space<any>> -> memref<128x128xbf16, #tpu.memory_space<any>>
        %c0_i32_40 = arith.constant 0 : i32
        %c0_i32_41 = arith.constant 0 : i32
        %53 = tpu.memref_slice %arg9[%50, %c0_i32_40, %c0_i32_41] : memref<2x128x128xbf16, #tpu.memory_space<vmem>> -> memref<1x128x128xbf16, #tpu.memory_space<vmem>>
        %54 = tpu.memref_squeeze %53 : memref<1x128x128xbf16, #tpu.memory_space<vmem>> -> memref<128x128xbf16, #tpu.memory_space<vmem>>
        %55 = tpu.memref_slice %arg10[%50] : memref<2x!tpu.dma_semaphore, #tpu.memory_space<semaphore_mem>> -> memref<1x!tpu.dma_semaphore, #tpu.memory_space<semaphore_mem>>
        %56 = tpu.memref_squeeze %55 : memref<1x!tpu.dma_semaphore, #tpu.memory_space<semaphore_mem>> -> memref<!tpu.dma_semaphore, #tpu.memory_space<semaphore_mem>>
        tpu.enqueue_dma source(%52 : memref<128x128xbf16, #tpu.memory_space<any>>) target(%54 : memref<128x128xbf16, #tpu.memory_space<vmem>>) target_semaphore(%56 : memref<!tpu.dma_semaphore, #tpu.memory_space<semaphore_mem>>)
      } else {
      }
      %37 = arith.truncf %arg12 : vector<16x128xf32> to vector<16x128xbf16>
      %38 = arith.index_cast %26 : i32 to index
      %c0_30 = arith.constant 0 : index
      %c0_31 = arith.constant 0 : index
      %39 = vector.load %arg9[%38, %c0_30, %c0_31] : memref<2x128x128xbf16, #tpu.memory_space<vmem>>, vector<1x128x128xbf16>
      %40 = vector.shape_cast %39 : vector<1x128x128xbf16> to vector<128x128xbf16>
      %cst_32 = arith.constant dense<0.000000e+00> : vector<16x128xf32>
      %41 = tpu.matmul %37, %40, %cst_32 {dimension_numbers = #tpu.dot_dimension_numbers<[1], [0], [0], [1], [0, 0, 1, 1], [], []>} : vector<16x128xbf16>, vector<128x128xbf16>, vector<16x128xf32> -> vector<16x128xf32>
      %42 = arith.index_cast %arg11 : i32 to index
      %c0_33 = arith.constant 0 : index
      %c0_34 = arith.constant 0 : index
      %43 = vector.load %arg5[%42, %c0_33, %c0_34] : memref<10x1x128xf32, #tpu.memory_space<vmem>>, vector<1x1x128xf32>
      %44 = vector.shape_cast %43 : vector<1x1x128xf32> to vector<1x128xf32>
      %45 = vector.broadcast %44 : vector<1x128xf32> to vector<16x128xf32>
      %46 = arith.addf %41, %45 : vector<16x128xf32>
      %cst_35 = arith.constant 0.000000e+00 : f32
      %47 = vector.broadcast %cst_35 : f32 to vector<16x128xf32>
      %48 = arith.maximumf %46, %47 : vector<16x128xf32>
      scf.yield %48 : vector<16x128xf32>
    }
    %c10_i32_13 = arith.constant 10 : i32
    %c0_14 = arith.constant 0 : index
    %c0_15 = arith.constant 0 : index
    %17 = vector.load %arg6[%c0_14, %c0_15] : memref<1x128xf32, #tpu.memory_space<vmem>>, vector<1x128xf32>
    %18 = vector.broadcast %17 : vector<1x128xf32> to vector<16x128xf32>
    %19 = arith.mulf %16, %18 : vector<16x128xf32>
    %cst_16 = arith.constant dense<0.000000e+00> : vector<16xf32>
    %20 = vector.multi_reduction <add>, %19, %cst_16 [1] : vector<16x128xf32> to vector<16xf32>
    %21 = vector.shape_cast %20 : vector<16xf32> to vector<16x1xf32>
    %c0_17 = arith.constant 0 : index
    %c0_18 = arith.constant 0 : index
    %22 = vector.load %arg7[%c0_17, %c0_18] : memref<1x1xf32, #tpu.memory_space<vmem>>, vector<1x1xf32>
    %23 = vector.broadcast %22 : vector<1x1xf32> to vector<16x1xf32>
    %24 = arith.addf %21, %23 : vector<16x1xf32>
    %c0_19 = arith.constant 0 : index
    %c0_20 = arith.constant 0 : index
    %25 = vector.load %arg8[%c0_19, %c0_20] : memref<16x1xf32, #tpu.memory_space<vmem>>, vector<16x1xf32>
    tpu.vector_store %arg8[%c0_19, %c0_20], %24 {strides = array<i32>} : memref<16x1xf32, #tpu.memory_space<vmem>>, vector<16x1xf32>,
    return
  }
  func.func @transform_0(%arg0: i32) -> (i32, i32) {
    %c0_i32 = arith.constant 0 : i32
    %c0_i32_0 = arith.constant 0 : i32
    return %arg0, %c0_i32 : i32, i32
  }
  func.func @transform_1(%arg0: i32) -> (i32, i32) {
    %c0_i32 = arith.constant 0 : i32
    %c0_i32_0 = arith.constant 0 : i32
    %c0_i32_1 = arith.constant 0 : i32
    return %c0_i32, %c0_i32_0 : i32, i32
  }
  func.func @transform_2(%arg0: i32) -> (i32, i32) {
    %c0_i32 = arith.constant 0 : i32
    %c0_i32_0 = arith.constant 0 : i32
    %c0_i32_1 = arith.constant 0 : i32
    return %c0_i32, %c0_i32_0 : i32, i32
  }
  func.func @transform_4(%arg0: i32) -> (i32, i32, i32) {
    %c0_i32 = arith.constant 0 : i32
    %c0_i32_0 = arith.constant 0 : i32
    %c0_i32_1 = arith.constant 0 : i32
    %c0_i32_2 = arith.constant 0 : i32
    return %c0_i32, %c0_i32_0, %c0_i32_1 : i32, i32, i32
  }
  func.func @transform_5(%arg0: i32) -> (i32, i32) {
    %c0_i32 = arith.constant 0 : i32
    %c0_i32_0 = arith.constant 0 : i32
    %c0_i32_1 = arith.constant 0 : i32
    return %c0_i32, %c0_i32_0 : i32, i32
  }
  func.func @transform_6(%arg0: i32) -> (i32, i32) {
    %c0_i32 = arith.constant 0 : i32
    %c0_i32_0 = arith.constant 0 : i32
    %c0_i32_1 = arith.constant 0 : i32
    return %c0_i32, %c0_i32_0 : i32, i32
  }
  func.func @transform_7(%arg0: i32) -> (i32, i32) {
    %c0_i32 = arith.constant 0 : i32
    %c0_i32_0 = arith.constant 0 : i32
    return %arg0, %c0_i32 : i32, i32
  }
}

</mosaic_0001>

<llo_original>
// kernel: mlp_forward.1
$region0: #{mlp_forward.1}
  #allocation0 [shape = 'u32[]', space=smem, size = 0x4, offset = 0x4, fixed_abs, tag = 'smem constant byte address 0x4 - core index']
  #allocation1 [shape = 'u32[144,128]{1,0:T(1,128)}', space=vmem, size = 0x12000, scoped, tag = 'internal scratch']
  #allocation2 [shape = 'bf16[2,128,128]{2,1,0:T(16,128)(2,1)}', space=vmem, size = 0x10000, scoped, tag = 'scratch operand']
  #allocation3 [shape = 's32[2]{0}', space=sflag, size = 0x8, scoped, tag = 'scratch operand']
  #allocation4 [shape = 'f32[1,1]{1,0:T(1,128)S(1)}', space=vmem, size = 0x200, scoped, tag = 'scoped memory for mlp_forward.1']
  #allocation5 [shape = 's32[]', space=sflag, size = 0x4, offset = 0, fixed_abs, tag = 'sflag constant byte address 0x0 - dummy sync flag']
  #allocation6 [shape = 's32[]', space=sflag, size = 0x4, offset = 0, fixed_abs, tag = 'sflag constant byte address 0x0 - dummy sync flag']
  #allocation7 [shape = 'u32[]', space=smem, size = 0x4, offset = 0x44, fixed_abs, tag = 'smem constant byte address 0x44 - assertion arg 0']
  #allocation8 [shape = 'u32[]', space=smem, size = 0x4, offset = 0x48, fixed_abs, tag = 'smem constant byte address 0x48 - assertion arg 1']
  #allocation9 [shape = 's32[]', space=sflag, size = 0x4, offset = 0, fixed_abs, tag = 'sflag constant byte address 0x0 - dummy sync flag']
  #allocation10 [shape = 's32[]', space=sflag, size = 0x4, offset = 0, fixed_abs, tag = 'sflag constant byte address 0x0 - dummy sync flag']
  %s0 = inlined_call_operand.vmem [shape: f32[16,8], index: 0, kind: input, shape index: {}]
  %s1 = inlined_call_operand.vmem [shape: bf16[8,128], index: 1, kind: input, shape index: {}]
  %s2 = inlined_call_operand.vmem [shape: f32[1,128], index: 2, kind: input, shape index: {}]
  %s3 = inlined_call_operand.hbm [shape: bf16[10,128,128], index: 3, kind: input, shape index: {}]
  %s4 = inlined_call_operand.vmem [shape: f32[10,1,128], index: 4, kind: input, shape index: {}]
  %s5 = inlined_call_operand.vmem [shape: f32[1,128], index: 5, kind: input, shape index: {}]
  %s6 = inlined_call_operand.<no memory space> [shape: f32[1,1], index: 6, kind: input, shape index: {}]
  %s7 = inlined_call_operand.vmem [shape: f32[16,1], index: 7, kind: output, shape index: {}]
  %s8 = sld [smem:[#allocation0]]
  $region53: #{mlp_forward.1} parent=0
    _
  %s10 = ssub.s32 1, %s8
  %s11 = scalar_select 0, %s10, %s8
  %v12 = vstv %s6
  %13 = vst [vmem:[#allocation4] sm:$0x1] %v12
  // Predicated region
  $region2: #{mlp_forward.1} parent=0 // pred_check
    _
  $region3: #{mlp_forward.1} parent=0 // pred_check_branch
    %15 = sbr.rel (0) target = $region5
  $region4: #{mlp_forward.1} parent=0 // pred_region
    _
  $region5: #{mlp_forward.1} parent=0 // pred_fallthru
    _
  // Predicated region
  $region6: #{mlp_forward.1} parent=0 // pred_check
    _
  $region7: #{mlp_forward.1} parent=0 // pred_check_branch
    %17 = sbr.rel (0) target = $region9
  $region8: #{mlp_forward.1} parent=0 // pred_region
    _
  $region9: #{mlp_forward.1} parent=0 // pred_fallthru
    _
  // Predicated region
  $region10: #{mlp_forward.1} parent=0 // pred_check
    _
  $region11: #{mlp_forward.1} parent=0 // pred_check_branch
    %19 = sbr.rel (0) target = $region13
  $region12: #{mlp_forward.1} parent=0 // pred_region
    _
  $region13: #{mlp_forward.1} parent=0 // pred_fallthru
    _
  // Predicated region
  $region14: #{mlp_forward.1} parent=0 // pred_check
    _
  $region15: #{mlp_forward.1} parent=0 // pred_check_branch
    %21 = sbr.rel (0) target = $region17
  $region16: #{mlp_forward.1} parent=0 // pred_region
    _
  $region17: #{mlp_forward.1} parent=0 // pred_fallthru
    _
  // Predicated region
  $region18: #{mlp_forward.1} parent=0 // pred_check
    _
  $region19: #{mlp_forward.1} parent=0 // pred_check_branch
    %23 = sbr.rel (0) target = $region21
  $region20: #{mlp_forward.1} parent=0 // pred_region
    _
  $region21: #{mlp_forward.1} parent=0 // pred_fallthru
    _
  // Predicated region
  $region22: #{mlp_forward.1} parent=0 // pred_check
    _
  $region23: #{mlp_forward.1} parent=0 // pred_check_branch
    %25 = sbr.rel (0) target = $region25
  $region24: #{mlp_forward.1} parent=0 // pred_region
    _
  $region25: #{mlp_forward.1} parent=0 // pred_fallthru
    _
  // Predicated region
  $region26: #{mlp_forward.1} parent=0 // pred_check
    _
  $region27: #{mlp_forward.1} parent=0 // pred_check_branch
    %28 = sbr.rel target = $region29
  $region28: #{mlp_forward.1} parent=0 // pred_region
    %29 = sst [smem:[#allocation7]] [#allocation6]
    %30 = sst [smem:[#allocation8]] [#allocation5]
  $region29: #{mlp_forward.1} parent=0 // pred_fallthru
    _
  %32 = shalt.err (0)
  %s34 = sshll.u32 [#allocation2], 4
  %s35 = int_to_ptr.vmem [resolvable:$true] %s34
  %37 = dma.hbm_to_vmem [thread:$0]  %s3, 1024, %s35, [#allocation3]
  %v38 = vld [vmem:[%s0] sm:$0xff]
  %v39 = vld [vmem:[%s0 + $0x8] sm:$0xff]
  %v40 = vpack.c.bf16 %v39, %v38
  %v41 = vld [vmem:[%s1] sm:$0xf]
  %v42 = vld [vmem:[%s2] sm:$0x1]
  %v44 = vlaneseq
  %v45 = vshrl.u32 %v44, 7
  %v46 = vsub.s32 0, %v45
  %v47 = vrot.slane %v42, %v46
  %vm49 = vcmask 64512
  %v51 = vsel %vm49, %v40, 0
  %vm53 = vcmask 1043456
  %v55 = vsel %vm53, %v41, 0
  %57 = vmatprep.subr.bf16.mxu0 0
  %58 = vmatpush1.bf16.msra.mxu0 %v55
  %59 = vmatprep.subr.bf16.mxu0 0
  %60 = vmatpush1.bf16.msra.mxu0 0
  %61 = vmatprep.subr.bf16.mxu0 0
  %62 = vmatpush1.bf16.msra.mxu0 0
  %63 = vmatprep.subr.bf16.mxu0 0
  %64 = vmatpush1.bf16.msra.mxu0 0
  %65 = vmatprep.subr.bf16.mxu0 0
  %66 = vmatpush1.bf16.msra.mxu0 0
  %67 = vmatprep.subr.bf16.mxu0 0
  %68 = vmatpush1.bf16.msra.mxu0 0
  %69 = vmatprep.subr.bf16.mxu0 0
  %70 = vmatpush1.bf16.msra.mxu0 0
  %71 = vmatprep.subr.bf16.mxu0 0
  %72 = vmatpush1.bf16.msra.mxu0 0
  %73 = vmatprep.subr.bf16.mxu0 0
  %74 = vmatpush1.bf16.msra.mxu0 0
  %75 = vmatprep.subr.bf16.mxu0 0
  %76 = vmatpush1.bf16.msra.mxu0 0
  %77 = vmatprep.subr.bf16.mxu0 0
  %78 = vmatpush1.bf16.msra.mxu0 0
  %79 = vmatprep.subr.bf16.mxu0 0
  %80 = vmatpush1.bf16.msra.mxu0 0
  %81 = vmatprep.subr.bf16.mxu0 0
  %82 = vmatpush1.bf16.msra.mxu0 0
  %83 = vmatprep.subr.bf16.mxu0 0
  %84 = vmatpush1.bf16.msra.mxu0 0
  %85 = vmatprep.subr.bf16.mxu0 0
  %86 = vmatpush1.bf16.msra.mxu0 0
  %87 = vmatprep.subr.bf16.mxu0 0
  %88 = vmatpush1.bf16.msra.mxu0 0
  %89 = vmatprep.mubr.bf16.mxu0 0
  %90 = vmatmul.mubr.bf16.gmra.mrb[0].mxu0 %v51
  %v91 = vpop.f32.mrb[0].mxu0
  %v92 = vadd.f32 %v47, %v91
  %v93 = vpop.f32.mrb[0].mxu0
  %v94 = vpop.f32.mrb[0].mxu0
  %v95 = vadd.f32 %v47, %v94
  %v96 = vpop.f32.mrb[0].mxu0
  %97 = vdwg.mxu0
  %v98 = vmax.f32 %v92, 0.0
  %v99 = vmax.f32 %v95, 0.0
  loop: start=0, step=1, limit=10
  $region30: #{mlp_forward.1} parent=0 // loop_pre_header
    _
  $region31: #{mlp_forward.1} parent=0 // loop_header
    %s101 = sphi 0, %s105
    %p102 = scmp.ge.s32.totalorder %s101, 10
    %v106 = vphi %v98, %v199
    %v107 = vphi %v99, %v200
  $region32: #{mlp_forward.1} parent=0 // loop_header_branch
    %104 = sbr.rel (%p102) target = $region36
  $region33: #{mlp_forward.1} parent=0 // loop_body
    %s108 = sand.u32 %s101, 1
    %s109 = smul.u32 %s108, 8
    %s110 = smul.addr %s109, 8
    %s111 = scalar_lea.vmem [#allocation2], %s110
    %s112 = scalar_lea.sflag [#allocation3], %s108
    %s113 = smul.u32 4, 16
    %s114 = smul.u32 %s113, 1
    %s115 = sshll.u32 %s114, 4
    %116 = dma.done %s112, %s115
    %s117 = sadd.s32 %s101, 1
    %p118 = scmp.lt.s32.totalorder %s117, 10
    // Predicated region
    $region37: #{mlp_forward.1} parent=33 // pred_check
      %p119 = pneg %p118
    $region38: #{mlp_forward.1} parent=33 // pred_check_branch
      %121 = sbr.rel (%p119) target = $region40
    $region39: #{mlp_forward.1} parent=33 // pred_region
      %s122 = ssub.s32 1, %s108
      %s123 = smul.u32 %s117, 16
      %s124 = smul.addr %s123, 64
      %s125 = scalar_lea.hbm %s3, %s124
      %s126 = smul.u32 %s122, 8
      %s127 = smul.addr %s126, 8
      %s128 = scalar_lea.vmem [#allocation2], %s127
      %s129 = scalar_lea.sflag [#allocation3], %s122
      // Predicated region
      $region41: #{mlp_forward.1} parent=39 // pred_check
        _
      $region42: #{mlp_forward.1} parent=39 // pred_check_branch
        %131 = sbr.rel target = $region44
      $region43: #{mlp_forward.1} parent=39 // pred_region
        %132 = sst [smem:[#allocation7]] [#allocation10]
        %133 = sst [smem:[#allocation8]] [#allocation9]
      $region44: #{mlp_forward.1} parent=39 // pred_fallthru
        _
      %135 = shalt.err (0)
      %s137 = sshll.u32 %s128, 4
      %s138 = int_to_ptr.vmem [resolvable:$true] %s137
      %140 = dma.hbm_to_vmem [thread:$0]  %s125, 1024, %s138, %s129
    $region40: #{mlp_forward.1} parent=33 // pred_fallthru
      _
    %v141 = vpack.c.bf16 %v107, %v106
    %v142 = vld [vmem:[%s111] sm:$0xff]
    %v143 = vld [vmem:[%s111 + $0x8] sm:$0xff]
    %v144 = vld [vmem:[%s111 + $0x10] sm:$0xff]
    %v145 = vld [vmem:[%s111 + $0x18] sm:$0xff]
    %v146 = vld [vmem:[%s111 + $0x20] sm:$0xff]
    %v147 = vld [vmem:[%s111 + $0x28] sm:$0xff]
    %v148 = vld [vmem:[%s111 + $0x30] sm:$0xff]
    %v149 = vld [vmem:[%s111 + $0x38] sm:$0xff]
    %s150 = scalar_lea.vmem %s4, %s101
    %v151 = vld [vmem:[%s150] sm:$0x1]
    %v153 = vlaneseq
    %v154 = vshrl.u32 %v153, 7
    %v155 = vsub.s32 0, %v154
    %v156 = vrot.slane %v151, %v155
    %158 = vmatprep.subr.bf16.mxu0 0
    %159 = vmatpush1.bf16.msra.mxu0 %v142
    %160 = vmatprep.subr.bf16.mxu0 0
    %161 = vmatpush1.bf16.msra.mxu0 %v143
    %162 = vmatprep.subr.bf16.mxu0 0
    %163 = vmatpush1.bf16.msra.mxu0 %v144
    %164 = vmatprep.subr.bf16.mxu0 0
    %165 = vmatpush1.bf16.msra.mxu0 %v145
    %166 = vmatprep.subr.bf16.mxu0 0
    %167 = vmatpush1.bf16.msra.mxu0 %v146
    %168 = vmatprep.subr.bf16.mxu0 0
    %169 = vmatpush1.bf16.msra.mxu0 %v147
    %170 = vmatprep.subr.bf16.mxu0 0
    %171 = vmatpush1.bf16.msra.mxu0 %v148
    %172 = vmatprep.subr.bf16.mxu0 0
    %173 = vmatpush1.bf16.msra.mxu0 %v149
    %174 = vmatprep.subr.bf16.mxu0 0
    %175 = vmatpush1.bf16.msra.mxu0 0
    %176 = vmatprep.subr.bf16.mxu0 0
    %177 = vmatpush1.bf16.msra.mxu0 0
    %178 = vmatprep.subr.bf16.mxu0 0
    %179 = vmatpush1.bf16.msra.mxu0 0
    %180 = vmatprep.subr.bf16.mxu0 0
    %181 = vmatpush1.bf16.msra.mxu0 0
    %182 = vmatprep.subr.bf16.mxu0 0
    %183 = vmatpush1.bf16.msra.mxu0 0
    %184 = vmatprep.subr.bf16.mxu0 0
    %185 = vmatpush1.bf16.msra.mxu0 0
    %186 = vmatprep.subr.bf16.mxu0 0
    %187 = vmatpush1.bf16.msra.mxu0 0
    %188 = vmatprep.subr.bf16.mxu0 0
    %189 = vmatpush1.bf16.msra.mxu0 0
    %190 = vmatprep.mubr.bf16.mxu0 0
    %191 = vmatmul.mubr.bf16.gmra.mrb[0].mxu0 %v141
    %v192 = vpop.f32.mrb[0].mxu0
    %v193 = vadd.f32 %v156, %v192
    %v194 = vpop.f32.mrb[0].mxu0
    %v195 = vpop.f32.mrb[0].mxu0
    %v196 = vadd.f32 %v156, %v195
    %v197 = vpop.f32.mrb[0].mxu0
    %198 = vdwg.mxu0
    %v199 = vmax.f32 %v193, 0.0
    %v200 = vmax.f32 %v196, 0.0
  $region34: #{mlp_forward.1} parent=0 // loop_footer
    %s105 = sadd.s32 1, %s101
  $region35: #{mlp_forward.1} parent=0 // loop_footer_branch
    %100 = sbr.rel target = $region31
  $region36: #{mlp_forward.1} parent=0 // loop_exit
    _
  %v201 = vld [vmem:[%s5] sm:$0x1]
  %v203 = vlaneseq
  %v204 = vshrl.u32 %v203, 7
  %v205 = vsub.s32 0, %v204
  %v206 = vrot.slane %v201, %v205
  %v208 = vmul.f32 %v106, %v206
  %v209 = vmul.f32 %v107, %v206
  %210 = vadd.xlane.f32.xlu0 %v208
  %v211 = vpop.xlane.xlu0 %210
  %212 = vadd.xlane.f32.xlu0 %v209
  %v213 = vpop.xlane.xlu0 %212
  %v214 = vld [vmem:[#allocation4] sm:$0x1]
  %v216 = vlaneseq
  %v217 = vshrl.u32 %v216, 7
  %v218 = vsub.s32 0, %v217
  %v219 = vrot.slane %v214, %v218
  %v221 = vadd.f32 %v211, %v219
  %v222 = vadd.f32 %v213, %v219
  %vm223 = vcmask 7168
  %224 = vst.msk [vmem:[%s7] sm:$0xff] %vm223, %v221
  %225 = vst.msk [vmem:[%s7 + $0x8] sm:$0xff] %vm223, %v222
  // Predicated region
  $region45: #{mlp_forward.1} parent=0 // pred_check
    _
  $region46: #{mlp_forward.1} parent=0 // pred_check_branch
    %227 = sbr.rel (0) target = $region48
  $region47: #{mlp_forward.1} parent=0 // pred_region
    _
  $region48: #{mlp_forward.1} parent=0 // pred_fallthru
    _
  // Predicated region
  $region49: #{mlp_forward.1} parent=0 // pred_check
    _
  $region50: #{mlp_forward.1} parent=0 // pred_check_branch
    %229 = sbr.rel (0) target = $region52
  $region51: #{mlp_forward.1} parent=0 // pred_region
    _
  $region52: #{mlp_forward.1} parent=0 // pred_fallthru
    _
  %230 = vsyncmov [#allocation3]
  %s231 = vpop.sfrf %230
  %p232 = scmp.eq.s32.totalorder %s231, 0
  %p233 = pneg %p232
  %235 = shalt.err (%p233)
  %s236 = scalar_lea.sflag [#allocation3], 1
  %237 = vsyncmov %s236
  %s238 = vpop.sfrf %237
  %p239 = scmp.eq.s32.totalorder %s238, 0
  %p240 = pneg %p239
  %242 = shalt.err (%p240)

</llo_original>
